<compile_context>
chip_gen: v5e
topology: v5e:2x2
jax: 0.10.0
libtpu: 0.0.40
codegen_flags: <defaults>
</compile_context>

<pallas_src>
import numpy as np
import jax
import jax.numpy as jnp
from jax.experimental import pallas as pl
from jax.experimental.pallas import tpu as pltpu

KSIZE = 3  # 3x3 conv


def _stem_kernel(patch_ref, w_ref, bias_ref, o_ref):
    """Fused Conv(as single im2col matmul) + folded-BN bias + ReLU.

    patch_ref : (1, K, TM)    im2col slab, K = 9*Cin, TM = spatial tile
    w_ref     : (Cout, K)     BN-scale-folded conv weights (transposed layout)
    bias_ref  : (Cout, 1)     folded BN bias
    o_ref     : (1, Cout, TM) output slab (lane-dense last dim)
    """
    acc = jnp.dot(w_ref[...], patch_ref[0],
                  preferred_element_type=jnp.float32)        # (Cout, TM)
    o_ref[0] = jnp.maximum(acc + bias_ref[...], 0.0)


def _pick_spatial_tile(M, max_tile=2048):
    """Largest lane-friendly tile of the flattened spatial dim."""
    if M <= max_tile:
        return M                                  # full extent is always legal
    for t in range(max_tile, 127, -128):          # multiples of 128
        if M % t == 0:
            return t
    return M                                      # fallback: full extent


def dis_stem_pallas(x_nchw, w_hwio, bn_scale, bn_bias):
    """x_nchw: (N, Cin, H, W) float32 -> (N, Cout, H, W) float32."""
    N, Cin, H, W = x_nchw.shape
    Cout = w_hwio.shape[-1]
    K = KSIZE * KSIZE * Cin
    M = H * W
    TM = _pick_spatial_tile(M)

    x = x_nchw.astype(jnp.float32)

    # ---- wrapper-side im2col (glue; tiny data, no activation transposes) ---
    # Zero-pad spatial dims by 1 (conv padding=1), stay in NCHW.
    x_pad = jnp.pad(x, ((0, 0), (0, 0), (1, 1), (1, 1)))
    cols = []
    for dh in range(KSIZE):
        for dw in range(KSIZE):
            cols.append(x_pad[:, :, dh:dh + H, dw:dw + W])   # (N, Cin, H, W)
    # (N, 9, Cin, H, W) -> (N, K, M); row index order = (dh, dw, cin).
    patches = jnp.stack(cols, axis=1).reshape(N, K, M)

    # ---- fold BN scale into the conv weights (trace-time, free) ------------
    # HWIO (3,3,Cin,Cout) -> (Cout, 3, 3, Cin) -> (Cout, K); column order
    # matches the im2col row order (dh, dw, cin).
    w_t = jnp.transpose(w_hwio, (3, 0, 1, 2)).reshape(Cout, K)
    w_folded = (w_t * bn_scale[:, None]).astype(jnp.float32)
    bias2d = bn_bias.reshape(Cout, 1).astype(jnp.float32)

    out_flat = pl.pallas_call(
        _stem_kernel,
        out_shape=jax.ShapeDtypeStruct((N, Cout, M), jnp.float32),
        grid_spec=pltpu.PrefetchScalarGridSpec(
            num_scalar_prefetch=0,
            grid=(N, M // TM),
            in_specs=[
                pl.BlockSpec((1, K, TM), lambda n, m: (n, 0, m)),
                pl.BlockSpec((Cout, K), lambda n, m: (0, 0)),
                pl.BlockSpec((Cout, 1), lambda n, m: (0, 0)),
            ],
            out_specs=pl.BlockSpec((1, Cout, TM), lambda n, m: (n, 0, m)),
        ),
        compiler_params=pltpu.CompilerParams(
            dimension_semantics=("parallel", "parallel")),
    )(patches, w_folded, bias2d)

    # Already channel-major: just split the spatial dim -> NCHW.
    return out_flat.reshape(N, Cout, H, W)


def _reference_stem(x_nchw, w_hwio, bn_scale, bn_bias):
    """Pure-JAX reference (lax conv) for correctness check."""
    w_oihw = jnp.transpose(w_hwio, (3, 2, 0, 1))
    y = jax.lax.conv_general_dilated(
        x_nchw, w_oihw, window_strides=(1, 1), padding=((1, 1), (1, 1)),
        dimension_numbers=("NCHW", "OIHW", "NCHW"))
    y = y * bn_scale.reshape(1, -1, 1, 1) + bn_bias.reshape(1, -1, 1, 1)
    return jnp.maximum(y, 0.0)


if __name__ == "__main__":
    key = jax.random.PRNGKey(0)
    k_x, k_w, k_g, k_b = jax.random.split(key, 4)

    # Shapes implied by the module: stem conv takes 2 input channels,
    # stemWidth * 2 = channels[0] * 2 = 16 output channels.
    N, Cin, H, W = 2, 2, 16, 16
    Cout = 16
    eps = 1e-5

    x = jax.random.normal(k_x, (N, Cin, H, W), dtype=jnp.float32)

    # Conv weight, HWIO, deterministic init (kaiming-ish scale).
    fan_in = Cin * KSIZE * KSIZE
    w = jax.random.normal(k_w, (KSIZE, KSIZE, Cin, Cout),
                          dtype=jnp.float32) * np.sqrt(2.0 / fan_in)

    # BatchNorm2d(16), inference mode: running_mean=0, running_var=1,
    # deterministic gamma/beta. Fold into per-channel scale/bias.
    gamma = 1.0 + 0.1 * jax.random.normal(k_g, (Cout,), dtype=jnp.float32)
    beta = 0.1 * jax.random.normal(k_b, (Cout,), dtype=jnp.float32)
    running_mean = jnp.zeros((Cout,), jnp.float32)
    running_var = jnp.ones((Cout,), jnp.float32)
    bn_scale = gamma / jnp.sqrt(running_var + eps)
    bn_bias = beta - running_mean * bn_scale

    out = dis_stem_pallas(x, w, bn_scale, bn_bias)
    out = jax.block_until_ready(out)

    ref = jax.block_until_ready(_reference_stem(x, w, bn_scale, bn_bias))
    assert out.shape == (N, Cout, H, W), out.shape
    assert np.allclose(np.asarray(out), np.asarray(ref), atol=1e-4, rtol=1e-4)

    print("KERNEL_OK")
</pallas_src>

<mosaic_0001>
module attributes {stable_mosaic.version = 11 : i64} {
  func.func @_stem_kernel(%arg0: i32, %arg1: i32, %arg2: memref<1x18x256xf32, #tpu.memory_space<vmem>>, %arg3: memref<16x18xf32, #tpu.memory_space<vmem>>, %arg4: memref<16x1xf32, #tpu.memory_space<vmem>>, %arg5: memref<1x16x256xf32, #tpu.memory_space<vmem>>) attributes {dimension_semantics = [#tpu.dimension_semantics<parallel>, #tpu.dimension_semantics<parallel>], iteration_bounds = array<i64: 2, 1>, scalar_prefetch = 0 : i64, scratch_operands = 0 : i64, tpu.core_type = #tpu.core_type<tc>, window_params = [{transform_indices = @transform_0, window_bounds = array<i64: 1, 18, 256>}, {pipeline_mode = #tpu.pipeline_mode<synchronous>, transform_indices = @transform_1, window_bounds = array<i64: 16, 18>}, {pipeline_mode = #tpu.pipeline_mode<synchronous>, transform_indices = @transform_2, window_bounds = array<i64: 16, 1>}, {transform_indices = @transform_3, window_bounds = array<i64: 1, 16, 256>}]} {
    %c0 = arith.constant 0 : index
    %c0_0 = arith.constant 0 : index
    %0 = vector.load %arg3[%c0, %c0_0] : memref<16x18xf32, #tpu.memory_space<vmem>>, vector<16x18xf32>
    %c0_1 = arith.constant 0 : index
    %c0_2 = arith.constant 0 : index
    %c0_3 = arith.constant 0 : index
    %1 = vector.load %arg2[%c0_1, %c0_2, %c0_3] : memref<1x18x256xf32, #tpu.memory_space<vmem>>, vector<1x18x256xf32>
    %2 = vector.shape_cast %1 : vector<1x18x256xf32> to vector<18x256xf32>
    %cst = arith.constant dense<0.000000e+00> : vector<16x256xf32>
    %3 = tpu.matmul %0, %2, %cst {dimension_numbers = #tpu.dot_dimension_numbers<[1], [0], [0], [1], [0, 0, 1, 1], [], []>} : vector<16x18xf32>, vector<18x256xf32>, vector<16x256xf32> -> vector<16x256xf32>
    %c0_4 = arith.constant 0 : index
    %c0_5 = arith.constant 0 : index
    %4 = vector.load %arg4[%c0_4, %c0_5] : memref<16x1xf32, #tpu.memory_space<vmem>>, vector<16x1xf32>
    %5 = vector.broadcast %4 : vector<16x1xf32> to vector<16x256xf32>
    %6 = arith.addf %3, %5 : vector<16x256xf32>
    %cst_6 = arith.constant 0.000000e+00 : f32
    %7 = vector.broadcast %cst_6 : f32 to vector<16x256xf32>
    %8 = arith.maximumf %6, %7 : vector<16x256xf32>
    %c0_7 = arith.constant 0 : index
    %c0_8 = arith.constant 0 : index
    %c0_9 = arith.constant 0 : index
    %9 = vector.load %arg5[%c0_7, %c0_8, %c0_9] : memref<1x16x256xf32, #tpu.memory_space<vmem>>, vector<1x16x256xf32>
    %10 = vector.shape_cast %9 : vector<1x16x256xf32> to vector<16x256xf32>
    %11 = vector.shape_cast %8 : vector<16x256xf32> to vector<1x16x256xf32>
    tpu.vector_store %arg5[%c0_7, %c0_8, %c0_9], %11 {strides = array<i32>} : memref<1x16x256xf32, #tpu.memory_space<vmem>>, vector<1x16x256xf32>,
    return
  }
  func.func @transform_0(%arg0: i32, %arg1: i32) -> (i32, i32, i32) {
    %c0_i32 = arith.constant 0 : i32
    %c0_i32_0 = arith.constant 0 : i32
    return %arg0, %c0_i32, %arg1 : i32, i32, i32
  }
  func.func @transform_1(%arg0: i32, %arg1: i32) -> (i32, i32) {
    %c0_i32 = arith.constant 0 : i32
    %c0_i32_0 = arith.constant 0 : i32
    %c0_i32_1 = arith.constant 0 : i32
    return %c0_i32, %c0_i32_0 : i32, i32
  }
  func.func @transform_2(%arg0: i32, %arg1: i32) -> (i32, i32) {
    %c0_i32 = arith.constant 0 : i32
    %c0_i32_0 = arith.constant 0 : i32
    %c0_i32_1 = arith.constant 0 : i32
    return %c0_i32, %c0_i32_0 : i32, i32
  }
  func.func @transform_3(%arg0: i32, %arg1: i32) -> (i32, i32, i32) {
    %c0_i32 = arith.constant 0 : i32
    %c0_i32_0 = arith.constant 0 : i32
    return %arg0, %c0_i32, %arg1 : i32, i32, i32
  }
}

</mosaic_0001>

<llo_original>
// kernel: tpu_custom_call.1
$region0: #{tpu_custom_call.1}
  #allocation0 [shape = 'u32[]', space=smem, size = 0x4, offset = 0x4, fixed_abs, tag = 'smem constant byte address 0x4 - core index']
  #allocation1 [shape = 'u32[72,128]{1,0:T(1,128)}', space=vmem, size = 0x9000, scoped, tag = 'internal scratch']
  %s0 = inlined_call_operand.vmem [shape: f32[2,18,256], index: 0, kind: input, shape index: {}]
  %s1 = inlined_call_operand.vmem [shape: f32[16,18], index: 1, kind: input, shape index: {}]
  %s2 = inlined_call_operand.vmem [shape: f32[16,1], index: 2, kind: input, shape index: {}]
  %s3 = inlined_call_operand.hbm [shape: f32[2,16,256], index: 3, kind: output, shape index: {}]
  %s4 = sld [smem:[#allocation0]]
  $region45: #{tpu_custom_call.1} parent=0
    _
  %s6 = ssub.s32 1, %s4
  %s7 = scalar_select 0, %s6, %s4
  $region1: #{tpu_custom_call.1} parent=0
    #allocation2 [shape = 'u8[32768]{0}', space=vmem, size = 0x8000, scoped, tag = 'output window, operand 0']
    #allocation3 [shape = 's32[2]{0}', space=sflag, size = 0x8, scoped, tag = 'scoped memory for tpu_custom_call.1']
    %8 = vsyncpa [#allocation3], 0
    %s9 = scalar_lea.sflag [#allocation3], 1
    %10 = vsyncpa %s9, 0
    loop: start=0, step=1, limit=4
    $region2: #{tpu_custom_call.1} parent=1 // loop_pre_header
      _
    $region3: #{tpu_custom_call.1} parent=1 // loop_header
      %s12 = sphi 0, %s16
      %p13 = scmp.ge.s32.totalorder %s12, 4
      %s19 = sphi 0, %s31
      %s20 = sphi 0, %s27
      %s21 = sphi 0, %s19
      %s22 = sphi 0, %s20
      %s23 = sphi 0, %s21
      %s24 = sphi 0, %s22
      %s36 = sphi 0, %s38
      %s39 = sphi 0, %s36
      %s40 = sphi 0, %s39
      %s56 = sphi 0, %s40
      %s60 = sphi 0, %s60
      %s62 = sphi 0, %s60
      %s63 = sphi 0, %s62
      %s77 = sphi 0, %s63
      %s81 = sphi 0, %s81
      %s83 = sphi 0, %s81
      %s84 = sphi 0, %s83
      %s98 = sphi 0, %s84
      %s106 = sphi 0, %s108
      %s109 = sphi 0, %s106
      %s110 = sphi 0, %s109
      %s126 = sphi 0, %s110
    $region4: #{tpu_custom_call.1} parent=1 // loop_header_branch
      %15 = sbr.rel (%p13) target = $region8
    $region5: #{tpu_custom_call.1} parent=1 // loop_body
      %s17 = ssub.s32 %s12, 1
      %s18 = ssub.s32 %s12, 2
      %s25 = sadd.s32 1, %s20
      %p26 = scmp.ge.s32.totalorder %s25, 1
      %s27 = scalar_select %p26, 0, %s25
      %s28 = sadd.s32 1, %s19
      %s29 = scalar_select %p26, %s28, %s19
      %p30 = scmp.ge.s32.totalorder %s29, 2
      %s31 = scalar_select %p30, 0, %s29
      %s32 = ssub.s32 %s19, %s31
      %s33 = ssub.s32 %s20, %s27
      %s34 = sor.u32 %s32, %s33
      %p35 = scmp.eq.s32.totalorder %s34, 0
      %s37 = sadd.s32 %s36, 1
      %s38 = scalar_select %p35, %s36, %s37
      %p41 = pneg %p35
      %p42 = scmp.eq.s32.totalorder %s12, 1
      %p43 = por %p41, %p42
      %p44 = scmp.ne.s32.totalorder %s36, %s39
      %p45 = scmp.eq.s32.totalorder %s12, 0
      %p46 = por %p44, %p45
      %p47 = scmp.ne.s32.totalorder %s36, %s39
      %p48 = scmp.eq.s32.totalorder %s17, 1
      %p49 = por %p47, %p48
      %p50 = scmp.ne.s32.totalorder %s39, %s40
      %p51 = scmp.eq.s32.totalorder %s17, 0
      %p52 = por %p50, %p51
      %p53 = scmp.ne.s32.totalorder %s39, %s40
      %p54 = scmp.eq.s32.totalorder %s18, 1
      %p55 = por %p53, %p54
      %p57 = scmp.ne.s32.totalorder %s40, %s56
      %p58 = scmp.eq.s32.totalorder %s18, 0
      %p59 = por %p57, %p58
      %s61 = sadd.s32 %s60, 1
      %p64 = scmp.eq.s32.totalorder %s12, 1
      %p65 = scmp.ne.s32.totalorder %s60, %s62
      %p66 = scmp.eq.s32.totalorder %s12, 0
      %p67 = por %p65, %p66
      %p68 = scmp.ne.s32.totalorder %s60, %s62
      %p69 = scmp.eq.s32.totalorder %s17, 1
      %p70 = por %p68, %p69
      %p71 = scmp.ne.s32.totalorder %s62, %s63
      %p72 = scmp.eq.s32.totalorder %s17, 0
      %p73 = por %p71, %p72
      %p74 = scmp.ne.s32.totalorder %s62, %s63
      %p75 = scmp.eq.s32.totalorder %s18, 1
      %p76 = por %p74, %p75
      %p78 = scmp.ne.s32.totalorder %s63, %s77
      %p79 = scmp.eq.s32.totalorder %s18, 0
      %p80 = por %p78, %p79
      %s82 = sadd.s32 %s81, 1
      %p85 = scmp.eq.s32.totalorder %s12, 1
      %p86 = scmp.ne.s32.totalorder %s81, %s83
      %p87 = scmp.eq.s32.totalorder %s12, 0
      %p88 = por %p86, %p87
      %p89 = scmp.ne.s32.totalorder %s81, %s83
      %p90 = scmp.eq.s32.totalorder %s17, 1
      %p91 = por %p89, %p90
      %p92 = scmp.ne.s32.totalorder %s83, %s84
      %p93 = scmp.eq.s32.totalorder %s17, 0
      %p94 = por %p92, %p93
      %p95 = scmp.ne.s32.totalorder %s83, %s84
      %p96 = scmp.eq.s32.totalorder %s18, 1
      %p97 = por %p95, %p96
      %p99 = scmp.ne.s32.totalorder %s84, %s98
      %p100 = scmp.eq.s32.totalorder %s18, 0
      %p101 = por %p99, %p100
      %s102 = ssub.s32 %s19, %s31
      %s103 = ssub.s32 %s20, %s27
      %s104 = sor.u32 %s102, %s103
      %p105 = scmp.eq.s32.totalorder %s104, 0
      %s107 = sadd.s32 %s106, 1
      %s108 = scalar_select %p105, %s106, %s107
      %p111 = pneg %p105
      %p112 = scmp.eq.s32.totalorder %s12, 1
      %p113 = por %p111, %p112
      %p114 = scmp.ne.s32.totalorder %s106, %s109
      %p115 = scmp.eq.s32.totalorder %s12, 0
      %p116 = por %p114, %p115
      %p117 = scmp.ne.s32.totalorder %s106, %s109
      %p118 = scmp.eq.s32.totalorder %s17, 1
      %p119 = por %p117, %p118
      %p120 = scmp.ne.s32.totalorder %s109, %s110
      %p121 = scmp.eq.s32.totalorder %s17, 0
      %p122 = por %p120, %p121
      %p123 = scmp.ne.s32.totalorder %s109, %s110
      %p124 = scmp.eq.s32.totalorder %s18, 1
      %p125 = por %p123, %p124
      %p127 = scmp.ne.s32.totalorder %s110, %s126
      %p128 = scmp.eq.s32.totalorder %s18, 0
      %p129 = por %p127, %p128
      %p130 = scmp.le.s32.totalorder 1, %s12
      %p131 = scmp.lt.s32.totalorder %s12, 3
      %p132 = pnand %p130, %p131
      %p133 = pneg %p132
      // Predicated region
      $region9: #{tpu_custom_call.1} parent=5 // pred_check
        _
      $region10: #{tpu_custom_call.1} parent=5 // pred_check_branch
        %135 = sbr.rel (%p132) target = $region12
      $region11: #{tpu_custom_call.1} parent=5 // pred_region
        %s136 = ssub.s32 %s12, 1
        // Predicated region
        $region13: #{tpu_custom_call.1} parent=11 // pred_check
          %p137 = pneg %p73
        $region14: #{tpu_custom_call.1} parent=11 // pred_check_branch
          %139 = sbr.rel (%p137) target = $region16
        $region15: #{tpu_custom_call.1} parent=11 // pred_region
          _
        $region16: #{tpu_custom_call.1} parent=11 // pred_fallthru
          _
        // Predicated region
        $region17: #{tpu_custom_call.1} parent=11 // pred_check
          %p140 = pneg %p94
        $region18: #{tpu_custom_call.1} parent=11 // pred_check_branch
          %142 = sbr.rel (%p140) target = $region20
        $region19: #{tpu_custom_call.1} parent=11 // pred_region
          _
        $region20: #{tpu_custom_call.1} parent=11 // pred_fallthru
          _
      $region12: #{tpu_custom_call.1} parent=5 // pred_fallthru
        _
      %p143 = scmp.lt.s32.totalorder %s12, 2
      // Predicated region
      $region21: #{tpu_custom_call.1} parent=5 // pred_check
        %p144 = pneg %p143
      $region22: #{tpu_custom_call.1} parent=5 // pred_check_branch
        %146 = sbr.rel (%p144) target = $region24
      $region23: #{tpu_custom_call.1} parent=5 // pred_region
        // Predicated region
        $region25: #{tpu_custom_call.1} parent=23 // pred_check
          %p147 = pneg %p46
        $region26: #{tpu_custom_call.1} parent=23 // pred_check_branch
          %149 = sbr.rel (%p147) target = $region28
        $region27: #{tpu_custom_call.1} parent=23 // pred_region
          %s150 = smul.u32 2, %s20
          %p151 = scmp.lt.s32.totalorder %s19, 1
          %s152 = scalar_select %p151, %s19, 1
          %p153 = scmp.lt.s32.totalorder %s150, 1
          %s154 = scalar_select %p153, %s150, 1
          %s155 = smul.addr %s152, 6
          %s156 = sadd.s32 %s154, %s155
          %s157 = smul.addr %s156, 8
          %s158 = scalar_lea.vmem %s0, %s157
          %s159 = smul.u32 2, %s20
        $region28: #{tpu_custom_call.1} parent=23 // pred_fallthru
          _
      $region24: #{tpu_custom_call.1} parent=5 // pred_fallthru
        _
      %p160 = scmp.le.s32.totalorder 1, %s12
      %p161 = scmp.lt.s32.totalorder %s12, 3
      %p162 = pnand %p160, %p161
      %p163 = pneg %p162
      // Predicated region
      $region29: #{tpu_custom_call.1} parent=5 // pred_check
        _
      $region30: #{tpu_custom_call.1} parent=5 // pred_check_branch
        %165 = sbr.rel (%p162) target = $region32
      $region31: #{tpu_custom_call.1} parent=5 // pred_region
        %s166 = ssub.s32 %s12, 1
        %s167 = smul.u32 2, %s22
        %p168 = scmp.lt.s32.totalorder %s21, 1
        %s169 = scalar_select %p168, %s21, 1
        %p170 = scmp.lt.s32.totalorder %s167, 1
        %s171 = scalar_select %p170, %s167, 1
        %s172 = smul.addr %s169, 6
        %s173 = sadd.s32 %s171, %s172
        %s174 = smul.addr %s173, 8
        %s175 = scalar_lea.vmem %s0, %s174
        %p176 = pneg %p52
        %p177 = pneg %p49
        %p178 = pneg %p73
        %p179 = pneg %p70
        %p180 = pneg %p94
        %p181 = pneg %p91
        %p182 = pneg %p122
        %p183 = pneg %p119
        %s184 = sand.u32 %s109, 1
        %s185 = scalar_lea.sflag [#allocation3], %s184
        %s186 = sand.u32 %s109, 1
        %s187 = smul.addr %s186, 32
        %s188 = scalar_lea.vmem [#allocation2], %s187
        %s189 = smul.u32 2, %s22
        %p190 = scmp.lt.s32.totalorder %s21, 1
        %s191 = scalar_select %p190, %s21, 1
        %p192 = scmp.lt.s32.totalorder %s189, 1
        %s193 = scalar_select %p192, %s189, 1
        %s194 = smul.addr %s191, 6
        %s195 = sadd.s32 %s193, %s194
        %s196 = smul.addr %s195, 8
        %s197 = scalar_lea.vmem %s0, %s196
        %s198 = smul.u32 2, %s22
        %s199 = smul.u32 2, %s22
        %v200 = vld [vmem:[%s1] sm:$0xff]
        %v201 = vld [vmem:[%s1 + $0x8] sm:$0xff]
        %v202 = vld [vmem:[%s197] sm:$0xff]
        %v203 = vld [vmem:[%s197 + $0x8] sm:$0xff]
        %v204 = vld [vmem:[%s197 + $0x10] sm:$0xff]
        %v205 = vld [vmem:[%s197 + $0x18] sm:$0xff]
        %v206 = vld [vmem:[%s197 + $0x20] sm:$0x3]
        %v207 = vld [vmem:[%s197 + $0x28] sm:$0x3]
        %v208 = vld [vmem:[%s2] sm:$0xff]
        %v209 = vld [vmem:[%s2 + $0x8] sm:$0xff]
        %211 = vset.pattern.permute.xlu0 0
        %212 = vperm.xlu0 %211, %v208
        %v213 = vpop.permute.xlu0 %212
        %216 = vset.pattern.permute.xlu0 0
        %217 = vperm.xlu0 %216, %v209
        %v218 = vpop.permute.xlu0 %217
        %vm220 = vcmask 146432
        %v222 = vsel %vm220, %v200, 0
        %v225 = vsel %vm220, %v201, 0
        %vm227 = vcmask 1041408
        %v229 = vsel %vm227, %v206, 0
        %v232 = vsel %vm227, %v207, 0
        %234 = vmatpush.msra.mxu0 0.0
        %235 = vmatpush.msra.mxu0 0.0
        %236 = vmatpush.msra.mxu0 0.0
        %237 = vmatpush.msra.mxu0 0.0
        %238 = vmatpush.msra.mxu0 0.0
        %239 = vmatpush.msra.mxu0 0.0
        %240 = vmatpush.msra.mxu0 0.0
        %241 = vmatpush.msra.mxu0 0.0
        %242 = vmatpush.msra.mxu0 0.0
        %243 = vmatpush.msra.mxu0 0.0
        %244 = vmatpush.msra.mxu0 0.0
        %245 = vmatpush.msra.mxu0 0.0
        %246 = vmatpush.msra.mxu0 0.0
        %247 = vmatpush.msra.mxu0 %v229
        %248 = vmatpush.msra.mxu0 %v204
        %249 = vmatpush.msra.mxu0 %v202
        %250 = vmatmul.f32.gmra.mxu0 %v222
        %v251 = vpop.f32.mrf.mxu0
        %v252 = vadd.f32 %v213, %v251
        %253 = vmatmul.f32.gmra.mxu0 %v225
        %v254 = vpop.f32.mrf.mxu0
        %v255 = vadd.f32 %v218, %v254
        %256 = vdwg.mxu0
        %257 = vmatpush.msra.mxu0 0.0
        %258 = vmatpush.msra.mxu0 0.0
        %259 = vmatpush.msra.mxu0 0.0
        %260 = vmatpush.msra.mxu0 0.0
        %261 = vmatpush.msra.mxu0 0.0
        %262 = vmatpush.msra.mxu0 0.0
        %263 = vmatpush.msra.mxu0 0.0
        %264 = vmatpush.msra.mxu0 0.0
        %265 = vmatpush.msra.mxu0 0.0
        %266 = vmatpush.msra.mxu0 0.0
        %267 = vmatpush.msra.mxu0 0.0
        %268 = vmatpush.msra.mxu0 0.0
        %269 = vmatpush.msra.mxu0 0.0
        %270 = vmatpush.msra.mxu0 %v232
        %271 = vmatpush.msra.mxu0 %v205
        %272 = vmatpush.msra.mxu0 %v203
        %273 = vmatmul.f32.gmra.mxu0 %v222
        %v274 = vpop.f32.mrf.mxu0
        %v275 = vadd.f32 %v213, %v274
        %276 = vmatmul.f32.gmra.mxu0 %v225
        %v277 = vpop.f32.mrf.mxu0
        %v278 = vadd.f32 %v218, %v277
        %279 = vdwg.mxu0
        %v280 = vmax.f32 %v252, 0.0
        %v281 = vmax.f32 %v275, 0.0
        %v282 = vmax.f32 %v255, 0.0
        %v283 = vmax.f32 %v278, 0.0
        %284 = vst [vmem:[%s188] sm:$0xff] %v280
        %285 = vst [vmem:[%s188 + $0x8] sm:$0xff] %v281
        %286 = vst [vmem:[%s188 + $0x10] sm:$0xff] %v282
        %287 = vst [vmem:[%s188 + $0x18] sm:$0xff] %v283
        %s288 = sand.u32 %s109, 1
        %s289 = scalar_lea.sflag [#allocation3], %s288
        %s290 = sand.u32 %s109, 1
        %s291 = smul.addr %s290, 32
        %s292 = scalar_lea.vmem [#allocation2], %s291
        // Predicated region
        $region33: #{tpu_custom_call.1} parent=31 // pred_check
          %p293 = pneg %p119
        $region34: #{tpu_custom_call.1} parent=31 // pred_check_branch
          %295 = sbr.rel (%p293) target = $region36
        $region35: #{tpu_custom_call.1} parent=31 // pred_region
          %s296 = smul.u32 2, %s22
          %298 = vsyncadd %s289, 0
          %s299 = smul.addr %s21, 4
          %s300 = sadd.s32 %s296, %s299
          %s301 = smul.addr %s300, 8
          %s302 = scalar_lea.hbm %s3, %s301
          %s303 = sshll.u32 %s292, 4
          %s304 = int_to_ptr.vmem [resolvable:$true] %s303
          %s305 = sshll.u32 %s302, 4
          %s306 = int_to_ptr.hbm [resolvable:$true] %s305
          %311 = dma.vmem_to_hbm [thread:$0]  %s304, 512, %s306, %s289, 256, 256, 16
        $region36: #{tpu_custom_call.1} parent=31 // pred_fallthru
          _
      $region32: #{tpu_custom_call.1} parent=5 // pred_fallthru
        _
      %p312 = scmp.le.s32.totalorder 2, %s12
      // Predicated region
      $region37: #{tpu_custom_call.1} parent=5 // pred_check
        %p313 = pneg %p312
      $region38: #{tpu_custom_call.1} parent=5 // pred_check_branch
        %315 = sbr.rel (%p313) target = $region40
      $region39: #{tpu_custom_call.1} parent=5 // pred_region
        %s316 = ssub.s32 %s12, 2
        // Predicated region
        $region41: #{tpu_custom_call.1} parent=39 // pred_check
          %p317 = pneg %p125
        $region42: #{tpu_custom_call.1} parent=39 // pred_check_branch
          %319 = sbr.rel (%p317) target = $region44
        $region43: #{tpu_custom_call.1} parent=39 // pred_region
          %s320 = sand.u32 %s110, 1
          %s321 = scalar_lea.sflag [#allocation3], %s320
          %s322 = sand.u32 %s110, 1
          %s323 = smul.addr %s322, 32
          %s324 = scalar_lea.vmem [#allocation2], %s323
          %326 = dma.done %s321, 512
        $region44: #{tpu_custom_call.1} parent=39 // pred_fallthru
          _
      $region40: #{tpu_custom_call.1} parent=5 // pred_fallthru
        _
    $region6: #{tpu_custom_call.1} parent=1 // loop_footer
      %s16 = sadd.s32 1, %s12
    $region7: #{tpu_custom_call.1} parent=1 // loop_footer_branch
      %11 = sbr.rel target = $region3
    $region8: #{tpu_custom_call.1} parent=1 // loop_exit
      _
    %327 = vsyncpa [#allocation3], 1
    %s328 = scalar_lea.sflag [#allocation3], 1
    %329 = vsyncpa %s328, 1

</llo_original>
